<compile_context>
chip_gen: v5e
topology: v5e:2x2
jax: 0.10.0
libtpu: 0.0.40
codegen_flags: <defaults>
</compile_context>

<pallas_src>
import functools

import jax
import jax.numpy as jnp
from jax.experimental import pallas as pl
from jax.experimental.pallas import tpu as pltpu

HIDDEN = 256
LANE = 128


def _round_up(x: int, m: int) -> int:
    return (x + m - 1) // m * m


def _actor_kernel(max_action, x_ref, w1_ref, b1_ref, w2_ref, b2_ref,
                  w3_ref, b3_ref, out_ref):
    # bf16 operands into the MXU, f32 accumulation; all elementwise math in f32.
    x = x_ref[...].astype(jnp.bfloat16)                               # (tb, state_dim)
    h1 = jnp.dot(x, w1_ref[...], preferred_element_type=jnp.float32) + b1_ref[...]
    h1 = jnp.maximum(h1, 0.0).astype(jnp.bfloat16)                    # (tb, 256)
    h2 = jnp.dot(h1, w2_ref[...], preferred_element_type=jnp.float32) + b2_ref[...]
    h2 = jnp.maximum(h2, 0.0).astype(jnp.bfloat16)                    # (tb, 256)
    y = jnp.dot(h2, w3_ref[...], preferred_element_type=jnp.float32) + b3_ref[...]
    out_ref[...] = max_action * jnp.tanh(y)                           # (tb, ad_p) f32


def prepare_actor_params(params):
    """One-time weight layout prep: transpose to (in, out), cast to bf16,
    zero-pad the output feature dim to a lane-dense 128 multiple."""
    action_dim = params["w3"].shape[0]
    ad_p = _round_up(action_dim, LANE)
    w1 = params["w1"].T.astype(jnp.bfloat16)                          # (state_dim, 256)
    b1 = params["b1"].reshape(1, HIDDEN).astype(jnp.float32)
    w2 = params["w2"].T.astype(jnp.bfloat16)                          # (256, 256)
    b2 = params["b2"].reshape(1, HIDDEN).astype(jnp.float32)
    w3 = jnp.zeros((HIDDEN, ad_p), jnp.bfloat16).at[:, :action_dim].set(
        params["w3"].T.astype(jnp.bfloat16))                          # (256, ad_p)
    b3 = jnp.zeros((1, ad_p), jnp.float32).at[:, :action_dim].set(
        params["b3"].reshape(1, -1).astype(jnp.float32))
    return {"w1": w1, "b1": b1, "w2": w2, "b2": b2, "w3": w3, "b3": b3}


@functools.partial(jax.jit, static_argnames=("max_action", "action_dim", "block_b"))
def actor_forward(state, prepped, *, max_action, action_dim, block_b: int = 2048):
    """state: (B, state_dim) f32. prepped: output of prepare_actor_params."""
    B, state_dim = state.shape
    ad_p = prepped["w3"].shape[1]

    # Batch tile: big tiles amortize per-step pipeline overhead (v5e/v6e); when
    # B >= 256 keep at least 2 grid steps so v7x's two TensorCores both get
    # work via dimension_semantics=("parallel",). tb is always either a
    # multiple of 8/128 or equal to the full batch dim, so the BlockSpec is
    # legal; ragged last blocks are masked by Pallas.
    tb = min(block_b, B)
    if B >= 256:
        tb = min(tb, _round_up(pl.cdiv(B, 2), LANE))
    grid = (pl.cdiv(B, tb),)

    rows = grid[0] * tb
    flops = 2 * rows * (state_dim * HIDDEN + HIDDEN * HIDDEN + HIDDEN * ad_p)
    bytes_accessed = (
        4 * (B * state_dim + B * ad_p)                                       # x + out (f32)
        + 2 * (state_dim * HIDDEN + HIDDEN * HIDDEN + HIDDEN * ad_p)         # weights (bf16)
        + 4 * (2 * HIDDEN + ad_p)                                            # biases (f32)
    )
    cost = pl.CostEstimate(flops=flops, transcendentals=rows * ad_p,
                           bytes_accessed=bytes_accessed)

    out_padded = pl.pallas_call(
        functools.partial(_actor_kernel, float(max_action)),
        out_shape=jax.ShapeDtypeStruct((B, ad_p), jnp.float32),
        grid=grid,
        in_specs=[
            pl.BlockSpec((tb, state_dim), lambda i: (i, 0)),         # state tile (pipelined)
            pl.BlockSpec((state_dim, HIDDEN), lambda i: (0, 0)),     # w1 (resident, bf16)
            pl.BlockSpec((1, HIDDEN), lambda i: (0, 0)),             # b1 (f32)
            pl.BlockSpec((HIDDEN, HIDDEN), lambda i: (0, 0)),        # w2 (resident, bf16)
            pl.BlockSpec((1, HIDDEN), lambda i: (0, 0)),             # b2 (f32)
            pl.BlockSpec((HIDDEN, ad_p), lambda i: (0, 0)),          # w3 (resident, bf16)
            pl.BlockSpec((1, ad_p), lambda i: (0, 0)),               # b3 (f32)
        ],
        out_specs=pl.BlockSpec((tb, ad_p), lambda i: (i, 0)),        # lane-dense output tile
        compiler_params=pltpu.CompilerParams(
            dimension_semantics=("parallel",)),
        cost_estimate=cost,
    )(state.astype(jnp.float32), prepped["w1"], prepped["b1"],
      prepped["w2"], prepped["b2"], prepped["w3"], prepped["b3"])

    return out_padded[:, :action_dim]


def init_params(key, state_dim, action_dim, hidden=HIDDEN):
    """Deterministic init (Kaiming-uniform-like, matching nn.Linear shapes/layout)."""
    ks = jax.random.split(key, 6)

    def lin(kw, kb, fan_in, fan_out):
        bound = 1.0 / jnp.sqrt(fan_in)
        w = jax.random.uniform(kw, (fan_out, fan_in), jnp.float32, -bound, bound)
        b = jax.random.uniform(kb, (fan_out,), jnp.float32, -bound, bound)
        return w, b

    w1, b1 = lin(ks[0], ks[1], state_dim, hidden)
    w2, b2 = lin(ks[2], ks[3], hidden, hidden)
    w3, b3 = lin(ks[4], ks[5], hidden, action_dim)
    return {"w1": w1, "b1": b1, "w2": w2, "b2": b2, "w3": w3, "b3": b3}


def reference_forward(state, params, max_action):
    h1 = jnp.maximum(state @ params["w1"].T + params["b1"], 0.0)
    h2 = jnp.maximum(h1 @ params["w2"].T + params["b2"], 0.0)
    return max_action * jnp.tanh(h2 @ params["w3"].T + params["b3"])


if __name__ == "__main__":
    key = jax.random.PRNGKey(0)
    k_param, k_state = jax.random.split(key)

    batch = 8
    state_dim = 17     # e.g. HalfCheetah obs dim
    action_dim = 6
    max_action = 1.0

    params = init_params(k_param, state_dim, action_dim)
    prepped = prepare_actor_params(params)           # one-time weight layout prep
    state = jax.random.normal(k_state, (batch, state_dim), dtype=jnp.float32)

    out = actor_forward(state, prepped, max_action=max_action, action_dim=action_dim)
    out = jax.block_until_ready(out)
    ref = reference_forward(state, params, max_action)
    assert out.shape == (batch, action_dim)
    # bf16 MXU operands, f32 accumulation -> looser tolerance than pure f32.
    assert jnp.allclose(out, ref, atol=3e-2, rtol=3e-2), "mismatch vs JAX reference"

    # Larger, non-tile-divisible batch: exercises the 2-step grid (TC sharding
    # on v7x) and the ragged / masked tail block.
    big_state = jax.random.normal(jax.random.PRNGKey(1), (1037, state_dim), jnp.float32)
    big_out = jax.block_until_ready(
        actor_forward(big_state, prepped, max_action=max_action, action_dim=action_dim))
    big_ref = reference_forward(big_state, params, max_action)
    assert big_out.shape == (1037, action_dim)
    assert jnp.allclose(big_out, big_ref, atol=3e-2, rtol=3e-2), "mismatch (large batch)"

    print("KERNEL_OK")
</pallas_src>

<mosaic_0001>
module attributes {stable_mosaic.version = 11 : i64} {
  func.func @_actor_kernel(%arg0: i32, %arg1: memref<8x17xf32, #tpu.memory_space<vmem>>, %arg2: memref<17x256xbf16, #tpu.memory_space<vmem>>, %arg3: memref<1x256xf32, #tpu.memory_space<vmem>>, %arg4: memref<256x256xbf16, #tpu.memory_space<vmem>>, %arg5: memref<1x256xf32, #tpu.memory_space<vmem>>, %arg6: memref<256x128xbf16, #tpu.memory_space<vmem>>, %arg7: memref<1x128xf32, #tpu.memory_space<vmem>>, %arg8: memref<8x128xf32, #tpu.memory_space<vmem>>) attributes {dimension_semantics = [#tpu.dimension_semantics<parallel>], iteration_bounds = array<i64: 1>, scalar_prefetch = 0 : i64, scratch_operands = 0 : i64, tpu.core_type = #tpu.core_type<tc>, window_params = [{transform_indices = @transform_0, window_bounds = array<i64: 8, 17>}, {pipeline_mode = #tpu.pipeline_mode<synchronous>, transform_indices = @transform_1, window_bounds = array<i64: 17, 256>}, {pipeline_mode = #tpu.pipeline_mode<synchronous>, transform_indices = @transform_2, window_bounds = array<i64: 1, 256>}, {pipeline_mode = #tpu.pipeline_mode<synchronous>, transform_indices = @transform_3, window_bounds = array<i64: 256, 256>}, {pipeline_mode = #tpu.pipeline_mode<synchronous>, transform_indices = @transform_4, window_bounds = array<i64: 1, 256>}, {pipeline_mode = #tpu.pipeline_mode<synchronous>, transform_indices = @transform_5, window_bounds = array<i64: 256, 128>}, {pipeline_mode = #tpu.pipeline_mode<synchronous>, transform_indices = @transform_6, window_bounds = array<i64: 1, 128>}, {transform_indices = @transform_7, window_bounds = array<i64: 8, 128>}]} {
    %c0 = arith.constant 0 : index
    %c0_0 = arith.constant 0 : index
    %0 = vector.load %arg1[%c0, %c0_0] : memref<8x17xf32, #tpu.memory_space<vmem>>, vector<8x17xf32>
    %1 = arith.truncf %0 : vector<8x17xf32> to vector<8x17xbf16>
    %c0_1 = arith.constant 0 : index
    %c0_2 = arith.constant 0 : index
    %2 = vector.load %arg2[%c0_1, %c0_2] : memref<17x256xbf16, #tpu.memory_space<vmem>>, vector<17x256xbf16>
    %cst = arith.constant dense<0.000000e+00> : vector<8x256xf32>
    %3 = tpu.matmul %1, %2, %cst {dimension_numbers = #tpu.dot_dimension_numbers<[1], [0], [0], [1], [0, 0, 1, 1], [], []>} : vector<8x17xbf16>, vector<17x256xbf16>, vector<8x256xf32> -> vector<8x256xf32>
    %c0_3 = arith.constant 0 : index
    %c0_4 = arith.constant 0 : index
    %4 = vector.load %arg3[%c0_3, %c0_4] : memref<1x256xf32, #tpu.memory_space<vmem>>, vector<1x256xf32>
    %5 = vector.broadcast %4 : vector<1x256xf32> to vector<8x256xf32>
    %6 = arith.addf %3, %5 : vector<8x256xf32>
    %cst_5 = arith.constant 0.000000e+00 : f32
    %7 = vector.broadcast %cst_5 : f32 to vector<8x256xf32>
    %8 = arith.maximumf %6, %7 : vector<8x256xf32>
    %9 = arith.truncf %8 : vector<8x256xf32> to vector<8x256xbf16>
    %c0_6 = arith.constant 0 : index
    %c0_7 = arith.constant 0 : index
    %10 = vector.load %arg4[%c0_6, %c0_7] : memref<256x256xbf16, #tpu.memory_space<vmem>>, vector<256x256xbf16>
    %cst_8 = arith.constant dense<0.000000e+00> : vector<8x256xf32>
    %11 = tpu.matmul %9, %10, %cst_8 {dimension_numbers = #tpu.dot_dimension_numbers<[1], [0], [0], [1], [0, 0, 1, 1], [], []>} : vector<8x256xbf16>, vector<256x256xbf16>, vector<8x256xf32> -> vector<8x256xf32>
    %c0_9 = arith.constant 0 : index
    %c0_10 = arith.constant 0 : index
    %12 = vector.load %arg5[%c0_9, %c0_10] : memref<1x256xf32, #tpu.memory_space<vmem>>, vector<1x256xf32>
    %13 = vector.broadcast %12 : vector<1x256xf32> to vector<8x256xf32>
    %14 = arith.addf %11, %13 : vector<8x256xf32>
    %cst_11 = arith.constant 0.000000e+00 : f32
    %15 = vector.broadcast %cst_11 : f32 to vector<8x256xf32>
    %16 = arith.maximumf %14, %15 : vector<8x256xf32>
    %17 = arith.truncf %16 : vector<8x256xf32> to vector<8x256xbf16>
    %c0_12 = arith.constant 0 : index
    %c0_13 = arith.constant 0 : index
    %18 = vector.load %arg6[%c0_12, %c0_13] : memref<256x128xbf16, #tpu.memory_space<vmem>>, vector<256x128xbf16>
    %cst_14 = arith.constant dense<0.000000e+00> : vector<8x128xf32>
    %19 = tpu.matmul %17, %18, %cst_14 {dimension_numbers = #tpu.dot_dimension_numbers<[1], [0], [0], [1], [0, 0, 1, 1], [], []>} : vector<8x256xbf16>, vector<256x128xbf16>, vector<8x128xf32> -> vector<8x128xf32>
    %c0_15 = arith.constant 0 : index
    %c0_16 = arith.constant 0 : index
    %20 = vector.load %arg7[%c0_15, %c0_16] : memref<1x128xf32, #tpu.memory_space<vmem>>, vector<1x128xf32>
    %21 = vector.broadcast %20 : vector<1x128xf32> to vector<8x128xf32>
    %22 = arith.addf %19, %21 : vector<8x128xf32>
    %23 = math.tanh %22 : vector<8x128xf32>
    %cst_17 = arith.constant 1.000000e+00 : f32
    %24 = vector.broadcast %cst_17 : f32 to vector<8x128xf32>
    %25 = arith.mulf %24, %23 : vector<8x128xf32>
    %c0_18 = arith.constant 0 : index
    %c0_19 = arith.constant 0 : index
    %26 = vector.load %arg8[%c0_18, %c0_19] : memref<8x128xf32, #tpu.memory_space<vmem>>, vector<8x128xf32>
    tpu.vector_store %arg8[%c0_18, %c0_19], %25 {strides = array<i32>} : memref<8x128xf32, #tpu.memory_space<vmem>>, vector<8x128xf32>,
    return
  }
  func.func @transform_0(%arg0: i32) -> (i32, i32) {
    %c0_i32 = arith.constant 0 : i32
    %c0_i32_0 = arith.constant 0 : i32
    return %arg0, %c0_i32 : i32, i32
  }
  func.func @transform_1(%arg0: i32) -> (i32, i32) {
    %c0_i32 = arith.constant 0 : i32
    %c0_i32_0 = arith.constant 0 : i32
    %c0_i32_1 = arith.constant 0 : i32
    return %c0_i32, %c0_i32_0 : i32, i32
  }
  func.func @transform_2(%arg0: i32) -> (i32, i32) {
    %c0_i32 = arith.constant 0 : i32
    %c0_i32_0 = arith.constant 0 : i32
    %c0_i32_1 = arith.constant 0 : i32
    return %c0_i32, %c0_i32_0 : i32, i32
  }
  func.func @transform_3(%arg0: i32) -> (i32, i32) {
    %c0_i32 = arith.constant 0 : i32
    %c0_i32_0 = arith.constant 0 : i32
    %c0_i32_1 = arith.constant 0 : i32
    return %c0_i32, %c0_i32_0 : i32, i32
  }
  func.func @transform_4(%arg0: i32) -> (i32, i32) {
    %c0_i32 = arith.constant 0 : i32
    %c0_i32_0 = arith.constant 0 : i32
    %c0_i32_1 = arith.constant 0 : i32
    return %c0_i32, %c0_i32_0 : i32, i32
  }
  func.func @transform_5(%arg0: i32) -> (i32, i32) {
    %c0_i32 = arith.constant 0 : i32
    %c0_i32_0 = arith.constant 0 : i32
    %c0_i32_1 = arith.constant 0 : i32
    return %c0_i32, %c0_i32_0 : i32, i32
  }
  func.func @transform_6(%arg0: i32) -> (i32, i32) {
    %c0_i32 = arith.constant 0 : i32
    %c0_i32_0 = arith.constant 0 : i32
    %c0_i32_1 = arith.constant 0 : i32
    return %c0_i32, %c0_i32_0 : i32, i32
  }
  func.func @transform_7(%arg0: i32) -> (i32, i32) {
    %c0_i32 = arith.constant 0 : i32
    %c0_i32_0 = arith.constant 0 : i32
    return %arg0, %c0_i32 : i32, i32
  }
}

</mosaic_0001>

<llo_original>
// kernel: actor_forward.1
$region0: #{actor_forward.1}
  #allocation0 [shape = 'u32[]', space=smem, size = 0x4, offset = 0x4, fixed_abs, tag = 'smem constant byte address 0x4 - core index']
  #allocation1 [shape = 'u32[72,128]{1,0:T(1,128)}', space=vmem, size = 0x9000, scoped, tag = 'internal scratch']
  %s0 = inlined_call_operand.hbm [shape: f32[8,17], index: 0, kind: input, shape index: {}]
  %s1 = inlined_call_operand.hbm [shape: bf16[17,256], index: 1, kind: input, shape index: {}]
  %s2 = inlined_call_operand.hbm [shape: f32[1,256], index: 2, kind: input, shape index: {}]
  %s3 = inlined_call_operand.hbm [shape: bf16[256,256], index: 3, kind: input, shape index: {}]
  %s4 = inlined_call_operand.hbm [shape: f32[1,256], index: 4, kind: input, shape index: {}]
  %s5 = inlined_call_operand.hbm [shape: bf16[256,128], index: 5, kind: input, shape index: {}]
  %s6 = inlined_call_operand.vmem [shape: f32[1,128], index: 6, kind: input, shape index: {}]
  %s7 = inlined_call_operand.hbm [shape: f32[8,128], index: 7, kind: output, shape index: {}]
  %s8 = sld [smem:[#allocation0]]
  $region62: #{actor_forward.1} parent=0
    _
  %s10 = ssub.s32 1, %s8
  %s11 = scalar_select 0, %s10, %s8
  $region1: #{actor_forward.1} parent=0
    #allocation2 [shape = 'u8[4096]{0}', space=vmem, size = 0x1000, scoped, tag = 'input window, operand 0, single buffered']
    #allocation3 [shape = 's32[1]{0}', space=sflag, size = 0x4, scoped, tag = 'scoped memory for actor_forward.1']
    #allocation4 [shape = 's32[1]{0}', space=sflag, size = 0x4, scoped, tag = 'scoped memory for actor_forward.1']
    #allocation5 [shape = 'u8[12288]{0}', space=vmem, size = 0x3000, scoped, tag = 'input window, operand 1, single buffered']
    #allocation6 [shape = 's32[1]{0}', space=sflag, size = 0x4, scoped, tag = 'scoped memory for actor_forward.1']
    #allocation7 [shape = 'u8[1024]{0}', space=vmem, size = 0x400, scoped, tag = 'input window, operand 2, single buffered']
    #allocation8 [shape = 'u8[131072]{0}', space=vmem, size = 0x20000, scoped, tag = 'input window, operand 3, single buffered']
    #allocation9 [shape = 's32[1]{0}', space=sflag, size = 0x4, scoped, tag = 'scoped memory for actor_forward.1']
    #allocation10 [shape = 'u8[1024]{0}', space=vmem, size = 0x400, scoped, tag = 'input window, operand 4, single buffered']
    #allocation11 [shape = 'u8[65536]{0}', space=vmem, size = 0x10000, scoped, tag = 'input window, operand 5, single buffered']
    #allocation12 [shape = 's32[1]{0}', space=sflag, size = 0x4, scoped, tag = 'scoped memory for actor_forward.1']
    #allocation13 [shape = 'u8[4096]{0}', space=vmem, size = 0x1000, scoped, tag = 'output window, operand 0, single buffered']
    %12 = vsyncpa [#allocation3], 0
    %13 = vsyncpa [#allocation6], 0
    %14 = vsyncpa [#allocation9], 0
    %15 = vsyncpa [#allocation12], 0
    %16 = vsyncpa [#allocation4], 0
    // Predicated region
    $region2: #{actor_forward.1} parent=1 // pred_check
      _
    $region3: #{actor_forward.1} parent=1 // pred_check_branch
      %18 = sbr.rel (0) target = $region5
    $region4: #{actor_forward.1} parent=1 // pred_region
      %20 = vsyncadd [#allocation3], 0
      %s22 = sshll.u32 %s0, 4
      %s23 = int_to_ptr.hbm [resolvable:$true] %s22
      %s24 = sshll.u32 [#allocation2], 4
      %s25 = int_to_ptr.vmem [resolvable:$true] %s24
      %27 = dma.hbm_to_vmem [thread:$0]  %s23, 128, %s25, [#allocation3]
    $region5: #{actor_forward.1} parent=1 // pred_fallthru
      _
    // Predicated region
    $region6: #{actor_forward.1} parent=1 // pred_check
      _
    $region7: #{actor_forward.1} parent=1 // pred_check_branch
      %29 = sbr.rel (0) target = $region9
    $region8: #{actor_forward.1} parent=1 // pred_region
      %31 = vsyncadd [#allocation6], 0
      %s32 = sshll.u32 %s1, 4
      %s33 = int_to_ptr.hbm [resolvable:$true] %s32
      %s34 = sshll.u32 [#allocation5], 4
      %s35 = int_to_ptr.vmem [resolvable:$true] %s34
      %40 = dma.hbm_to_vmem [thread:$0]  %s33, 384, %s35, [#allocation6], 128, 128, 8
    $region9: #{actor_forward.1} parent=1 // pred_fallthru
      _
    // Predicated region
    $region10: #{actor_forward.1} parent=1 // pred_check
      _
    $region11: #{actor_forward.1} parent=1 // pred_check_branch
      %42 = sbr.rel (0) target = $region13
    $region12: #{actor_forward.1} parent=1 // pred_region
      %44 = vsyncadd [#allocation6], 0
      %s46 = sshll.u32 %s2, 4
      %s47 = int_to_ptr.hbm [resolvable:$true] %s46
      %s48 = sshll.u32 [#allocation7], 4
      %s49 = int_to_ptr.vmem [resolvable:$true] %s48
      %51 = dma.hbm_to_vmem [thread:$0]  %s47, 32, %s49, [#allocation6]
    $region13: #{actor_forward.1} parent=1 // pred_fallthru
      _
    // Predicated region
    $region14: #{actor_forward.1} parent=1 // pred_check
      _
    $region15: #{actor_forward.1} parent=1 // pred_check_branch
      %53 = sbr.rel (0) target = $region17
    $region16: #{actor_forward.1} parent=1 // pred_region
      %55 = vsyncadd [#allocation9], 0
      %s56 = sshll.u32 %s3, 4
      %s57 = int_to_ptr.hbm [resolvable:$true] %s56
      %s58 = sshll.u32 [#allocation8], 4
      %s59 = int_to_ptr.vmem [resolvable:$true] %s58
      %64 = dma.hbm_to_vmem [thread:$0]  %s57, 4096, %s59, [#allocation9], 128, 128, 8
    $region17: #{actor_forward.1} parent=1 // pred_fallthru
      _
    // Predicated region
    $region18: #{actor_forward.1} parent=1 // pred_check
      _
    $region19: #{actor_forward.1} parent=1 // pred_check_branch
      %66 = sbr.rel (0) target = $region21
    $region20: #{actor_forward.1} parent=1 // pred_region
      %68 = vsyncadd [#allocation9], 0
      %s70 = sshll.u32 %s4, 4
      %s71 = int_to_ptr.hbm [resolvable:$true] %s70
      %s72 = sshll.u32 [#allocation10], 4
      %s73 = int_to_ptr.vmem [resolvable:$true] %s72
      %75 = dma.hbm_to_vmem [thread:$0]  %s71, 32, %s73, [#allocation9]
    $region21: #{actor_forward.1} parent=1 // pred_fallthru
      _
    // Predicated region
    $region22: #{actor_forward.1} parent=1 // pred_check
      _
    $region23: #{actor_forward.1} parent=1 // pred_check_branch
      %77 = sbr.rel (0) target = $region25
    $region24: #{actor_forward.1} parent=1 // pred_region
      %79 = vsyncadd [#allocation12], 0
      %s80 = sshll.u32 %s5, 4
      %s81 = int_to_ptr.hbm [resolvable:$true] %s80
      %s82 = sshll.u32 [#allocation11], 4
      %s83 = int_to_ptr.vmem [resolvable:$true] %s82
      %88 = dma.hbm_to_vmem [thread:$0]  %s81, 2048, %s83, [#allocation12], 64, 64, 4
    $region25: #{actor_forward.1} parent=1 // pred_fallthru
      _
    // Predicated region
    $region26: #{actor_forward.1} parent=1 // pred_check
      _
    $region27: #{actor_forward.1} parent=1 // pred_check_branch
      %90 = sbr.rel (0) target = $region29
    $region28: #{actor_forward.1} parent=1 // pred_region
      _
    $region29: #{actor_forward.1} parent=1 // pred_fallthru
      _
    // Predicated region
    $region30: #{actor_forward.1} parent=1 // pred_check
      _
    $region31: #{actor_forward.1} parent=1 // pred_check_branch
      %92 = sbr.rel (0) target = $region33
    $region32: #{actor_forward.1} parent=1 // pred_region
      %94 = dma.done [#allocation3], 128
    $region33: #{actor_forward.1} parent=1 // pred_fallthru
      _
    // Predicated region
    $region34: #{actor_forward.1} parent=1 // pred_check
      _
    $region35: #{actor_forward.1} parent=1 // pred_check_branch
      %96 = sbr.rel (0) target = $region37
    $region36: #{actor_forward.1} parent=1 // pred_region
      %98 = dma.done [#allocation6], 384
    $region37: #{actor_forward.1} parent=1 // pred_fallthru
      _
    // Predicated region
    $region38: #{actor_forward.1} parent=1 // pred_check
      _
    $region39: #{actor_forward.1} parent=1 // pred_check_branch
      %100 = sbr.rel (0) target = $region41
    $region40: #{actor_forward.1} parent=1 // pred_region
      %102 = dma.done [#allocation6], 32
    $region41: #{actor_forward.1} parent=1 // pred_fallthru
      _
    // Predicated region
    $region42: #{actor_forward.1} parent=1 // pred_check
      _
    $region43: #{actor_forward.1} parent=1 // pred_check_branch
      %104 = sbr.rel (0) target = $region45
    $region44: #{actor_forward.1} parent=1 // pred_region
      %106 = dma.done [#allocation9], 4096
    $region45: #{actor_forward.1} parent=1 // pred_fallthru
      _
    // Predicated region
    $region46: #{actor_forward.1} parent=1 // pred_check
      _
    $region47: #{actor_forward.1} parent=1 // pred_check_branch
      %108 = sbr.rel (0) target = $region49
    $region48: #{actor_forward.1} parent=1 // pred_region
      %110 = dma.done [#allocation9], 32
    $region49: #{actor_forward.1} parent=1 // pred_fallthru
      _
    // Predicated region
    $region50: #{actor_forward.1} parent=1 // pred_check
      _
    $region51: #{actor_forward.1} parent=1 // pred_check_branch
      %112 = sbr.rel (0) target = $region53
    $region52: #{actor_forward.1} parent=1 // pred_region
      %114 = dma.done [#allocation12], 2048
    $region53: #{actor_forward.1} parent=1 // pred_fallthru
      _
    %v116 = vld [vmem:[#allocation2] sm:$0xff]
    %v117 = vpack.c.bf16 %v116, %v116
    %v118 = vld [vmem:[#allocation5] sm:$0xff]
    %v119 = vld [vmem:[#allocation5 + $0x8] sm:$0xff]
    %v120 = vld [vmem:[#allocation5 + $0x10] sm:$0x11]
    %v121 = vld [vmem:[#allocation7] sm:$0x3]
    %v123 = vperm.slane %v121, 0
    %v124 = vperm.slane %v121, 1
    %v130 = vunpack.c.l.b16 %v118
    %v131 = vunpack.c.h.b16 %v118
    %v132 = vunpack.c.l.b16 %v119
    %v133 = vunpack.c.h.b16 %v119
    %v134 = vunpack.c.l.b16 %v120
    %v135 = vunpack.c.h.b16 %v120
    %v136 = vpack.c.b16 %v132, %v130
    %v137 = vpack.c.b16 %v133, %v131
    %v138 = vpack.c.b16 %v134, %v134
    %v139 = vpack.c.b16 %v135, %v135
    %vm142 = vcmask 138240
    %v144 = vsel %vm142, %v117, 0
    %vm146 = vcmask 1040384
    %v147 = vsel 0, 4294967295, 65535
    %v148 = vsel %vm146, %v147, 0
    %v150 = vand.u32 %v138, %v148
    %v153 = vand.u32 %v139, %v148
    %155 = vmatpush.bf16.msra.mxu0 0
    %156 = vmatpush.bf16.msra.mxu0 0
    %157 = vmatpush.bf16.msra.mxu0 0
    %158 = vmatpush.bf16.msra.mxu0 0
    %159 = vmatpush.bf16.msra.mxu0 0
    %160 = vmatpush.bf16.msra.mxu0 0
    %161 = vmatpush.bf16.msra.mxu0 %v150
    %162 = vmatpush.bf16.msra.mxu0 %v136
    %163 = vmatmul.bf16.gmra.mxu0 %v144
    %v164 = vpop.f32.mrf.mxu0
    %v165 = vadd.f32 %v123, %v164
    %v166 = vpop.f32.mrf.mxu0
    %167 = vdwg.mxu0
    %168 = vmatpush.bf16.msra.mxu0 0
    %169 = vmatpush.bf16.msra.mxu0 0
    %170 = vmatpush.bf16.msra.mxu0 0
    %171 = vmatpush.bf16.msra.mxu0 0
    %172 = vmatpush.bf16.msra.mxu0 0
    %173 = vmatpush.bf16.msra.mxu0 0
    %174 = vmatpush.bf16.msra.mxu0 %v153
    %175 = vmatpush.bf16.msra.mxu0 %v137
    %176 = vmatmul.bf16.gmra.mxu0 %v144
    %v177 = vpop.f32.mrf.mxu0
    %v178 = vadd.f32 %v124, %v177
    %v179 = vpop.f32.mrf.mxu0
    %180 = vdwg.mxu0
    %v181 = vmax.f32 %v165, 0.0
    %v182 = vmax.f32 %v178, 0.0
    %v183 = vpack.c.bf16 %v181, %v181
    %v184 = vpack.c.bf16 %v182, %v182
    %v185 = vld [vmem:[#allocation8] sm:$0xff]
    %v186 = vld [vmem:[#allocation8 + $0x8] sm:$0xff]
    %v187 = vld [vmem:[#allocation8 + $0x10] sm:$0xff]
    %v188 = vld [vmem:[#allocation8 + $0x18] sm:$0xff]
    %v189 = vld [vmem:[#allocation8 + $0x20] sm:$0xff]
    %v190 = vld [vmem:[#allocation8 + $0x28] sm:$0xff]
    %v191 = vld [vmem:[#allocation8 + $0x30] sm:$0xff]
    %v192 = vld [vmem:[#allocation8 + $0x38] sm:$0xff]
    %v193 = vld [vmem:[#allocation8 + $0x40] sm:$0xff]
    %v194 = vld [vmem:[#allocation8 + $0x48] sm:$0xff]
    %v195 = vld [vmem:[#allocation8 + $0x50] sm:$0xff]
    %v196 = vld [vmem:[#allocation8 + $0x58] sm:$0xff]
    %v197 = vld [vmem:[#allocation8 + $0x60] sm:$0xff]
    %v198 = vld [vmem:[#allocation8 + $0x68] sm:$0xff]
    %v199 = vld [vmem:[#allocation8 + $0x70] sm:$0xff]
    %v200 = vld [vmem:[#allocation8 + $0x78] sm:$0xff]
    %v201 = vld [vmem:[#allocation8 + $0x80] sm:$0xff]
    %v202 = vld [vmem:[#allocation8 + $0x88] sm:$0xff]
    %v203 = vld [vmem:[#allocation8 + $0x90] sm:$0xff]
    %v204 = vld [vmem:[#allocation8 + $0x98] sm:$0xff]
    %v205 = vld [vmem:[#allocation8 + $0xa0] sm:$0xff]
    %v206 = vld [vmem:[#allocation8 + $0xa8] sm:$0xff]
    %v207 = vld [vmem:[#allocation8 + $0xb0] sm:$0xff]
    %v208 = vld [vmem:[#allocation8 + $0xb8] sm:$0xff]
    %v209 = vld [vmem:[#allocation8 + $0xc0] sm:$0xff]
    %v210 = vld [vmem:[#allocation8 + $0xc8] sm:$0xff]
    %v211 = vld [vmem:[#allocation8 + $0xd0] sm:$0xff]
    %v212 = vld [vmem:[#allocation8 + $0xd8] sm:$0xff]
    %v213 = vld [vmem:[#allocation8 + $0xe0] sm:$0xff]
    %v214 = vld [vmem:[#allocation8 + $0xe8] sm:$0xff]
    %v215 = vld [vmem:[#allocation8 + $0xf0] sm:$0xff]
    %v216 = vld [vmem:[#allocation8 + $0xf8] sm:$0xff]
    %v217 = vld [vmem:[#allocation10] sm:$0x3]
    %v219 = vperm.slane %v217, 0
    %v220 = vperm.slane %v217, 1
    %v255 = vunpack.c.l.b16 %v185
    %v256 = vunpack.c.h.b16 %v185
    %v257 = vunpack.c.l.b16 %v186
    %v258 = vunpack.c.h.b16 %v186
    %v259 = vunpack.c.l.b16 %v187
    %v260 = vunpack.c.h.b16 %v187
    %v261 = vunpack.c.l.b16 %v188
    %v262 = vunpack.c.h.b16 %v188
    %v263 = vunpack.c.l.b16 %v189
    %v264 = vunpack.c.h.b16 %v189
    %v265 = vunpack.c.l.b16 %v190
    %v266 = vunpack.c.h.b16 %v190
    %v267 = vunpack.c.l.b16 %v191
    %v268 = vunpack.c.h.b16 %v191
    %v269 = vunpack.c.l.b16 %v192
    %v270 = vunpack.c.h.b16 %v192
    %v271 = vunpack.c.l.b16 %v193
    %v272 = vunpack.c.h.b16 %v193
    %v273 = vunpack.c.l.b16 %v194
    %v274 = vunpack.c.h.b16 %v194
    %v275 = vunpack.c.l.b16 %v195
    %v276 = vunpack.c.h.b16 %v195
    %v277 = vunpack.c.l.b16 %v196
    %v278 = vunpack.c.h.b16 %v196
    %v279 = vunpack.c.l.b16 %v197
    %v280 = vunpack.c.h.b16 %v197
    %v281 = vunpack.c.l.b16 %v198
    %v282 = vunpack.c.h.b16 %v198
    %v283 = vunpack.c.l.b16 %v199
    %v284 = vunpack.c.h.b16 %v199
    %v285 = vunpack.c.l.b16 %v200
    %v286 = vunpack.c.h.b16 %v200
    %v287 = vunpack.c.l.b16 %v201
    %v288 = vunpack.c.h.b16 %v201
    %v289 = vunpack.c.l.b16 %v202
    %v290 = vunpack.c.h.b16 %v202
    %v291 = vunpack.c.l.b16 %v203
    %v292 = vunpack.c.h.b16 %v203
    %v293 = vunpack.c.l.b16 %v204
    %v294 = vunpack.c.h.b16 %v204
    %v295 = vunpack.c.l.b16 %v205
    %v296 = vunpack.c.h.b16 %v205
    %v297 = vunpack.c.l.b16 %v206
    %v298 = vunpack.c.h.b16 %v206
    %v299 = vunpack.c.l.b16 %v207
    %v300 = vunpack.c.h.b16 %v207
    %v301 = vunpack.c.l.b16 %v208
    %v302 = vunpack.c.h.b16 %v208
    %v303 = vunpack.c.l.b16 %v209
    %v304 = vunpack.c.h.b16 %v209
    %v305 = vunpack.c.l.b16 %v210
    %v306 = vunpack.c.h.b16 %v210
    %v307 = vunpack.c.l.b16 %v211
    %v308 = vunpack.c.h.b16 %v211
    %v309 = vunpack.c.l.b16 %v212
    %v310 = vunpack.c.h.b16 %v212
    %v311 = vunpack.c.l.b16 %v213
    %v312 = vunpack.c.h.b16 %v213
    %v313 = vunpack.c.l.b16 %v214
    %v314 = vunpack.c.h.b16 %v214
    %v315 = vunpack.c.l.b16 %v215
    %v316 = vunpack.c.h.b16 %v215
    %v317 = vunpack.c.l.b16 %v216
    %v318 = vunpack.c.h.b16 %v216
    %v319 = vpack.c.b16 %v257, %v255
    %v320 = vpack.c.b16 %v258, %v256
    %v321 = vpack.c.b16 %v261, %v259
    %v322 = vpack.c.b16 %v262, %v260
    %v323 = vpack.c.b16 %v265, %v263
    %v324 = vpack.c.b16 %v266, %v264
    %v325 = vpack.c.b16 %v269, %v267
    %v326 = vpack.c.b16 %v270, %v268
    %v327 = vpack.c.b16 %v273, %v271
    %v328 = vpack.c.b16 %v274, %v272
    %v329 = vpack.c.b16 %v277, %v275
    %v330 = vpack.c.b16 %v278, %v276
    %v331 = vpack.c.b16 %v281, %v279
    %v332 = vpack.c.b16 %v282, %v280
    %v333 = vpack.c.b16 %v285, %v283
    %v334 = vpack.c.b16 %v286, %v284
    %v335 = vpack.c.b16 %v289, %v287
    %v336 = vpack.c.b16 %v290, %v288
    %v337 = vpack.c.b16 %v293, %v291
    %v338 = vpack.c.b16 %v294, %v292
    %v339 = vpack.c.b16 %v297, %v295
    %v340 = vpack.c.b16 %v298, %v296
    %v341 = vpack.c.b16 %v301, %v299
    %v342 = vpack.c.b16 %v302, %v300
    %v343 = vpack.c.b16 %v305, %v303
    %v344 = vpack.c.b16 %v306, %v304
    %v345 = vpack.c.b16 %v309, %v307
    %v346 = vpack.c.b16 %v310, %v308
    %v347 = vpack.c.b16 %v313, %v311
    %v348 = vpack.c.b16 %v314, %v312
    %v349 = vpack.c.b16 %v317, %v315
    %v350 = vpack.c.b16 %v318, %v316
    %383 = vmatpush.bf16.msra.mxu0 %v333
    %384 = vmatpush.bf16.msra.mxu0 %v331
    %385 = vmatpush.bf16.msra.mxu0 %v329
    %386 = vmatpush.bf16.msra.mxu0 %v327
    %387 = vmatpush.bf16.msra.mxu0 %v325
    %388 = vmatpush.bf16.msra.mxu0 %v323
    %389 = vmatpush.bf16.msra.mxu0 %v321
    %390 = vmatpush.bf16.msra.mxu0 %v319
    %391 = vmatmul.bf16.gmra.mxu0 %v183
    %v392 = vpop.f32.mrf.mxu0
    %v393 = vadd.f32 %v219, %v392
    %v394 = vpop.f32.mrf.mxu0
    %395 = vdwg.mxu0
    %396 = vmatpush.bf16.msra.mxu0 %v349
    %397 = vmatpush.bf16.msra.mxu0 %v347
    %398 = vmatpush.bf16.msra.mxu0 %v345
    %399 = vmatpush.bf16.msra.mxu0 %v343
    %400 = vmatpush.bf16.msra.mxu0 %v341
    %401 = vmatpush.bf16.msra.mxu0 %v339
    %402 = vmatpush.bf16.msra.mxu0 %v337
    %403 = vmatpush.bf16.msra.mxu0 %v335
    %404 = vmatmul.bf16.gmra.mxu0 %v184
    %v405 = vpop.f32.mrf.mxu0
    %v406 = vadd.f32 %v393, %v405
    %v407 = vpop.f32.mrf.mxu0
    %408 = vdwg.mxu0
    %409 = vmatpush.bf16.msra.mxu0 %v334
    %410 = vmatpush.bf16.msra.mxu0 %v332
    %411 = vmatpush.bf16.msra.mxu0 %v330
    %412 = vmatpush.bf16.msra.mxu0 %v328
    %413 = vmatpush.bf16.msra.mxu0 %v326
    %414 = vmatpush.bf16.msra.mxu0 %v324
    %415 = vmatpush.bf16.msra.mxu0 %v322
    %416 = vmatpush.bf16.msra.mxu0 %v320
    %417 = vmatmul.bf16.gmra.mxu0 %v183
    %v418 = vpop.f32.mrf.mxu0
    %v419 = vadd.f32 %v220, %v418
    %v420 = vpop.f32.mrf.mxu0
    %421 = vdwg.mxu0
    %422 = vmatpush.bf16.msra.mxu0 %v350
    %423 = vmatpush.bf16.msra.mxu0 %v348
    %424 = vmatpush.bf16.msra.mxu0 %v346
    %425 = vmatpush.bf16.msra.mxu0 %v344
    %426 = vmatpush.bf16.msra.mxu0 %v342
    %427 = vmatpush.bf16.msra.mxu0 %v340
    %428 = vmatpush.bf16.msra.mxu0 %v338
    %429 = vmatpush.bf16.msra.mxu0 %v336
    %430 = vmatmul.bf16.gmra.mxu0 %v184
    %v431 = vpop.f32.mrf.mxu0
    %v432 = vadd.f32 %v419, %v431
    %v433 = vpop.f32.mrf.mxu0
    %434 = vdwg.mxu0
    %v435 = vmax.f32 %v406, 0.0
    %v436 = vmax.f32 %v432, 0.0
    %v437 = vpack.c.bf16 %v435, %v435
    %v438 = vpack.c.bf16 %v436, %v436
    %v439 = vld [vmem:[#allocation11] sm:$0xf]
    %v440 = vld [vmem:[#allocation11 + $0x4] sm:$0xf]
    %v441 = vld [vmem:[#allocation11 + $0x8] sm:$0xf]
    %v442 = vld [vmem:[#allocation11 + $0xc] sm:$0xf]
    %v443 = vld [vmem:[#allocation11 + $0x10] sm:$0xf]
    %v444 = vld [vmem:[#allocation11 + $0x14] sm:$0xf]
    %v445 = vld [vmem:[#allocation11 + $0x18] sm:$0xf]
    %v446 = vld [vmem:[#allocation11 + $0x1c] sm:$0xf]
    %v447 = vld [vmem:[#allocation11 + $0x20] sm:$0xf]
    %v448 = vld [vmem:[#allocation11 + $0x24] sm:$0xf]
    %v449 = vld [vmem:[#allocation11 + $0x28] sm:$0xf]
    %v450 = vld [vmem:[#allocation11 + $0x2c] sm:$0xf]
    %v451 = vld [vmem:[#allocation11 + $0x30] sm:$0xf]
    %v452 = vld [vmem:[#allocation11 + $0x34] sm:$0xf]
    %v453 = vld [vmem:[#allocation11 + $0x38] sm:$0xf]
    %v454 = vld [vmem:[#allocation11 + $0x3c] sm:$0xf]
    %v455 = vld [vmem:[#allocation11 + $0x40] sm:$0xf]
    %v456 = vld [vmem:[#allocation11 + $0x44] sm:$0xf]
    %v457 = vld [vmem:[#allocation11 + $0x48] sm:$0xf]
    %v458 = vld [vmem:[#allocation11 + $0x4c] sm:$0xf]
    %v459 = vld [vmem:[#allocation11 + $0x50] sm:$0xf]
    %v460 = vld [vmem:[#allocation11 + $0x54] sm:$0xf]
    %v461 = vld [vmem:[#allocation11 + $0x58] sm:$0xf]
    %v462 = vld [vmem:[#allocation11 + $0x5c] sm:$0xf]
    %v463 = vld [vmem:[#allocation11 + $0x60] sm:$0xf]
    %v464 = vld [vmem:[#allocation11 + $0x64] sm:$0xf]
    %v465 = vld [vmem:[#allocation11 + $0x68] sm:$0xf]
    %v466 = vld [vmem:[#allocation11 + $0x6c] sm:$0xf]
    %v467 = vld [vmem:[#allocation11 + $0x70] sm:$0xf]
    %v468 = vld [vmem:[#allocation11 + $0x74] sm:$0xf]
    %v469 = vld [vmem:[#allocation11 + $0x78] sm:$0xf]
    %v470 = vld [vmem:[#allocation11 + $0x7c] sm:$0xf]
    %v471 = vld [vmem:[%s6] sm:$0x1]
    %v473 = vperm.slane %v471, 0
    %v507 = vunpack.c.l.b16 %v439
    %v508 = vunpack.c.l.b16 %v440
    %v509 = vunpack.c.l.b16 %v441
    %v510 = vunpack.c.l.b16 %v442
    %v511 = vunpack.c.l.b16 %v443
    %v512 = vunpack.c.l.b16 %v444
    %v513 = vunpack.c.l.b16 %v445
    %v514 = vunpack.c.l.b16 %v446
    %v515 = vunpack.c.l.b16 %v447
    %v516 = vunpack.c.l.b16 %v448
    %v517 = vunpack.c.l.b16 %v449
    %v518 = vunpack.c.l.b16 %v450
    %v519 = vunpack.c.l.b16 %v451
    %v520 = vunpack.c.l.b16 %v452
    %v521 = vunpack.c.l.b16 %v453
    %v522 = vunpack.c.l.b16 %v454
    %v523 = vunpack.c.l.b16 %v455
    %v524 = vunpack.c.l.b16 %v456
    %v525 = vunpack.c.l.b16 %v457
    %v526 = vunpack.c.l.b16 %v458
    %v527 = vunpack.c.l.b16 %v459
    %v528 = vunpack.c.l.b16 %v460
    %v529 = vunpack.c.l.b16 %v461
    %v530 = vunpack.c.l.b16 %v462
    %v531 = vunpack.c.l.b16 %v463
    %v532 = vunpack.c.l.b16 %v464
    %v533 = vunpack.c.l.b16 %v465
    %v534 = vunpack.c.l.b16 %v466
    %v535 = vunpack.c.l.b16 %v467
    %v536 = vunpack.c.l.b16 %v468
    %v537 = vunpack.c.l.b16 %v469
    %v538 = vunpack.c.l.b16 %v470
    %v539 = vpack.c.b16 %v508, %v507
    %v540 = vpack.c.b16 %v510, %v509
    %v541 = vpack.c.b16 %v512, %v511
    %v542 = vpack.c.b16 %v514, %v513
    %v543 = vpack.c.b16 %v516, %v515
    %v544 = vpack.c.b16 %v518, %v517
    %v545 = vpack.c.b16 %v520, %v519
    %v546 = vpack.c.b16 %v522, %v521
    %v547 = vpack.c.b16 %v524, %v523
    %v548 = vpack.c.b16 %v526, %v525
    %v549 = vpack.c.b16 %v528, %v527
    %v550 = vpack.c.b16 %v530, %v529
    %v551 = vpack.c.b16 %v532, %v531
    %v552 = vpack.c.b16 %v534, %v533
    %v553 = vpack.c.b16 %v536, %v535
    %v554 = vpack.c.b16 %v538, %v537
    %571 = vmatpush.bf16.msra.mxu0 %v546
    %572 = vmatpush.bf16.msra.mxu0 %v545
    %573 = vmatpush.bf16.msra.mxu0 %v544
    %574 = vmatpush.bf16.msra.mxu0 %v543
    %575 = vmatpush.bf16.msra.mxu0 %v542
    %576 = vmatpush.bf16.msra.mxu0 %v541
    %577 = vmatpush.bf16.msra.mxu0 %v540
    %578 = vmatpush.bf16.msra.mxu0 %v539
    %579 = vmatmul.bf16.gmra.mxu0 %v437
    %v580 = vpop.f32.mrf.mxu0
    %v581 = vadd.f32 %v473, %v580
    %v582 = vpop.f32.mrf.mxu0
    %583 = vdwg.mxu0
    %584 = vmatpush.bf16.msra.mxu0 %v554
    %585 = vmatpush.bf16.msra.mxu0 %v553
    %586 = vmatpush.bf16.msra.mxu0 %v552
    %587 = vmatpush.bf16.msra.mxu0 %v551
    %588 = vmatpush.bf16.msra.mxu0 %v550
    %589 = vmatpush.bf16.msra.mxu0 %v549
    %590 = vmatpush.bf16.msra.mxu0 %v548
    %591 = vmatpush.bf16.msra.mxu0 %v547
    %592 = vmatmul.bf16.gmra.mxu0 %v438
    %v593 = vpop.f32.mrf.mxu0
    %v594 = vadd.f32 %v581, %v593
    %v595 = vpop.f32.mrf.mxu0
    %596 = vdwg.mxu0
    %v597 = vtanh.pop %v594
    %598 = vst [vmem:[#allocation13] sm:$0xff] %v597
    // Predicated region
    $region54: #{actor_forward.1} parent=1 // pred_check
      _
    $region55: #{actor_forward.1} parent=1 // pred_check_branch
      %600 = sbr.rel (0) target = $region57
    $region56: #{actor_forward.1} parent=1 // pred_region
      %602 = vsyncadd [#allocation4], 0
      %s604 = sshll.u32 [#allocation13], 4
      %s605 = int_to_ptr.vmem [resolvable:$true] %s604
      %s606 = sshll.u32 %s7, 4
      %s607 = int_to_ptr.hbm [resolvable:$true] %s606
      %609 = dma.vmem_to_hbm [thread:$0]  %s605, 128, %s607, [#allocation4]
    $region57: #{actor_forward.1} parent=1 // pred_fallthru
      _
    // Predicated region
    $region58: #{actor_forward.1} parent=1 // pred_check
      _
    $region59: #{actor_forward.1} parent=1 // pred_check_branch
      %611 = sbr.rel (0) target = $region61
    $region60: #{actor_forward.1} parent=1 // pred_region
      %613 = dma.done [#allocation4], 128
    $region61: #{actor_forward.1} parent=1 // pred_fallthru
      _
    %614 = vsyncpa [#allocation3], 1
    %615 = vsyncpa [#allocation6], 1
    %616 = vsyncpa [#allocation9], 1
    %617 = vsyncpa [#allocation12], 1
    %618 = vsyncpa [#allocation4], 1

</llo_original>
